<compile_context>
chip_gen: v5e
topology: v5e:2x2
jax: 0.10.0
libtpu: 0.0.40
codegen_flags: <defaults>
</compile_context>

<pallas_src>
import jax
import jax.numpy as jnp
from jax import lax
from jax.experimental import pallas as pl
from jax.experimental.pallas import tpu as pltpu


def _make_content_kernel(H, W, use_roll):
    """Build the streaming-reduction kernel for a fixed (H, W) plane shape."""

    def kernel(y_ref, t_ref, o_ref, mse_acc, gx_acc, gy_acc):
        step = pl.program_id(0)

        @pl.when(step == 0)
        def _init():
            mse_acc[...] = jnp.zeros_like(mse_acc)
            gx_acc[...] = jnp.zeros_like(gx_acc)
            gy_acc[...] = jnp.zeros_like(gy_acc)

        # Inputs arrive in their native dtype; do the math / accumulation in f32.
        d = y_ref[...].astype(jnp.float32) - t_ref[...].astype(jnp.float32)

        # Per-step partials only collapse the leading (nc) axis: pure VPU adds
        # that hide under the streaming DMA. The expensive cross-sublane/lane
        # reduce to scalars happens exactly once, in the final grid step.
        mse_acc[...] += jnp.sum(d * d, axis=0)

        if use_roll:
            # Aligned plane: shift via the XLU (free slot alongside VPU/loads)
            # and mask the wrap-around row/column. All intermediates keep the
            # full, lane-dense (nc, H, W) shape -> no relayout copies for
            # (H-1)/(W-1) shaped values.
            dgx = pltpu.roll(d, shift=H - 1, axis=1) - d  # == d[:, i+1, :] - d[:, i, :]
            dgy = pltpu.roll(d, shift=W - 1, axis=2) - d  # == d[..., j+1]  - d[..., j]
            row = lax.broadcasted_iota(jnp.int32, (H, W), 0)
            col = lax.broadcasted_iota(jnp.int32, (H, W), 1)
            gx_acc[...] += jnp.where(row < H - 1, jnp.sum(jnp.abs(dgx), axis=0), 0.0)
            gy_acc[...] += jnp.where(col < W - 1, jnp.sum(jnp.abs(dgy), axis=0), 0.0)
        else:
            # General-shape fallback (H % 8 != 0 or W % 128 != 0): Mosaic's
            # rotate wants (8,128)-aligned planes, so use shifted slices here.
            dgx = d[:, 1:, :] - d[:, :-1, :]
            dgy = d[:, :, 1:] - d[:, :, :-1]
            gx_acc[...] += jnp.sum(jnp.abs(dgx), axis=0)
            gy_acc[...] += jnp.sum(jnp.abs(dgy), axis=0)

        @pl.when(step == pl.num_programs(0) - 1)
        def _finalize():
            o_ref[0] = jnp.sum(mse_acc[...])
            o_ref[1] = jnp.sum(gx_acc[...])
            o_ref[2] = jnp.sum(gy_acc[...])

    return kernel


def content_loss(y, t, *, max_tile_bytes=2 * 1024 * 1024):
    """Pallas implementation of Content.forward for the matching-key case.

    y, t: NCHW arrays of identical shape/dtype (float dtypes; bf16/f16 are
    streamed at native width and accumulated in f32 inside the kernel).
    Returns scalar f32: 0.2 * mse(y, t) + 0.4 * (l1(gradx) + l1(grady)).
    """
    assert y.shape == t.shape and y.dtype == t.dtype
    *lead, H, W = y.shape
    nc = 1
    for s in lead:
        nc *= int(s)
    yf = y.reshape(nc, H, W)
    tf = t.reshape(nc, H, W)

    itemsize = yf.dtype.itemsize
    plane_bytes = H * W * itemsize

    # Tile along the leading N*C axis only (no halo needed for the H/W diffs).
    # Target ~2 MiB per input tile: big enough to amortize the per-step
    # overhead, small enough that 2 inputs x 2 pipeline buffers stay well
    # inside the scoped-VMEM budget on every generation (incl. v7x's 64 MiB).
    max_tile = max(1, max_tile_bytes // plane_bytes)
    nc_tile = 1
    for cand in range(min(nc, max_tile), 0, -1):
        if nc % cand == 0:
            nc_tile = cand
            break
    nblocks = nc // nc_tile
    tile_bytes = nc_tile * plane_bytes

    use_roll = (H % 8 == 0) and (W % 128 == 0)
    if use_roll:
        scratch = [
            pltpu.VMEM((H, W), jnp.float32),
            pltpu.VMEM((H, W), jnp.float32),
            pltpu.VMEM((H, W), jnp.float32),
        ]
    else:
        scratch = [
            pltpu.VMEM((H, W), jnp.float32),
            pltpu.VMEM((H - 1, W), jnp.float32),
            pltpu.VMEM((H, W - 1), jnp.float32),
        ]
    acc_bytes = 3 * H * W * 4

    # 2 inputs x 2 pipeline buffers + accumulators + headroom; floor at 16 MiB
    # (safe default on every generation), cap at the 32 MiB scoped limit.
    vmem_limit = int(min(32 << 20, max(16 << 20, 4 * tile_bytes + acc_bytes + (2 << 20))))

    grid_spec = pltpu.PrefetchScalarGridSpec(
        num_scalar_prefetch=0,
        grid=(nblocks,),
        in_specs=[
            pl.BlockSpec((nc_tile, H, W), lambda i: (i, 0, 0)),
            pl.BlockSpec((nc_tile, H, W), lambda i: (i, 0, 0)),
        ],
        out_specs=pl.BlockSpec(memory_space=pltpu.SMEM),
        scratch_shapes=scratch,
    )

    sums = pl.pallas_call(
        _make_content_kernel(H, W, use_roll),
        out_shape=jax.ShapeDtypeStruct((3,), jnp.float32),
        grid_spec=grid_spec,
        compiler_params=pltpu.CompilerParams(
            # The single scratch accumulator makes the grid axis a sequential
            # reduction -> "arbitrary" for correctness.
            # TODO(synk): per-core partial outputs + final combine would let
            # v7x's two TensorCores each stream half the tensor.
            dimension_semantics=("arbitrary",),
            vmem_limit_bytes=vmem_limit,
        ),
        cost_estimate=pl.CostEstimate(
            flops=12 * yf.size,
            transcendentals=0,
            bytes_accessed=2 * yf.size * itemsize + 3 * 4,
        ),
    )(yf, tf)

    n_mse = float(nc * H * W)
    n_gx = float(nc * (H - 1) * W)
    n_gy = float(nc * H * (W - 1))

    mse = sums[0] / n_mse
    grad = sums[1] / n_gx + sums[2] / n_gy
    return mse * 0.2 + grad * 0.4


def _content_loss_ref(y, t):
    """Pure-JAX reference mirroring the PyTorch module."""
    y = y.astype(jnp.float32)
    t = t.astype(jnp.float32)
    mse = jnp.mean((y - t) ** 2)
    ygx = y[..., 1:, :] - y[..., :-1, :]
    ygy = y[..., 1:] - y[..., :-1]
    tgx = t[..., 1:, :] - t[..., :-1, :]
    tgy = t[..., 1:] - t[..., :-1]
    grad = jnp.mean(jnp.abs(ygx - tgx)) + jnp.mean(jnp.abs(ygy - tgy))
    return mse * 0.2 + grad * 0.4


class Content:
    """JAX/Pallas mirror of the PyTorch Content module (dict-based forward)."""

    def __init__(self, branch="diffuse", target="diffuse"):
        self.branch = branch
        self.target = target

    def __call__(self, _output, _input):
        if self.branch not in _output or self.target not in _input:
            return jnp.asarray(0, dtype=jnp.int32)
        return content_loss(_output[self.branch], _input[self.target])


if __name__ == "__main__":
    key = jax.random.PRNGKey(0)
    k1, k2 = jax.random.split(key)
    # Small NCHW shapes: batch=2, channels=4, spatial=16x16
    y = jax.random.normal(k1, (2, 4, 16, 16), dtype=jnp.float32)
    t = jax.random.normal(k2, (2, 4, 16, 16), dtype=jnp.float32)

    module = Content(branch="diffuse", target="diffuse")
    out = jax.block_until_ready(module({"diffuse": y}, {"diffuse": t}))
    ref = _content_loss_ref(y, t)
    assert jnp.allclose(out, ref, rtol=1e-5, atol=1e-6), (out, ref)

    # Multi-block grid: force tiny tiles so the init/accumulate/finalize
    # accumulator logic is exercised across several grid steps.
    out_tiled = jax.block_until_ready(content_loss(y, t, max_tile_bytes=2048))
    assert jnp.allclose(out_tiled, ref, rtol=1e-5, atol=1e-6), (out_tiled, ref)

    # Native bf16 inputs stream at half the HBM traffic; accumulation stays f32.
    yb = y.astype(jnp.bfloat16)
    tb = t.astype(jnp.bfloat16)
    out_bf16 = jax.block_until_ready(content_loss(yb, tb))
    ref_bf16 = _content_loss_ref(yb, tb)
    assert jnp.allclose(out_bf16, ref_bf16, rtol=1e-4, atol=1e-5), (out_bf16, ref_bf16)

    # Missing-key path returns 0 like the PyTorch module.
    zero = module({"specular": y}, {"diffuse": t})
    assert int(zero) == 0

    print("KERNEL_OK")
</pallas_src>

<mosaic_0001>
module attributes {stable_mosaic.version = 11 : i64} {
  func.func @kernel(%arg0: i32, %arg1: memref<8x16x16xf32, #tpu.memory_space<vmem>>, %arg2: memref<8x16x16xf32, #tpu.memory_space<vmem>>, %arg3: memref<3xf32, #tpu.memory_space<smem>>, %arg4: memref<16x16xf32, #tpu.memory_space<vmem>>, %arg5: memref<15x16xf32, #tpu.memory_space<vmem>>, %arg6: memref<16x15xf32, #tpu.memory_space<vmem>>) attributes {dimension_semantics = [#tpu.dimension_semantics<arbitrary>], iteration_bounds = array<i64: 1>, scalar_prefetch = 0 : i64, scratch_operands = 3 : i64, tpu.core_type = #tpu.core_type<tc>, window_params = [{transform_indices = @transform_0, window_bounds = array<i64: 8, 16, 16>}, {transform_indices = @transform_1, window_bounds = array<i64: 8, 16, 16>}, {transform_indices = @transform_2, window_bounds = array<i64: 3>}]} {
    %c0_i32 = arith.constant 0 : i32
    %0 = arith.cmpi eq, %arg0, %c0_i32 : i32
    %1 = arith.extui %0 : i1 to i32
    %c0_i32_0 = arith.constant 0 : i32
    %2 = arith.cmpi ne, %1, %c0_i32_0 : i32
    scf.if %2 {
      %cst_22 = arith.constant 0.000000e+00 : f32
      %30 = vector.broadcast %cst_22 : f32 to vector<16x16xf32>
      %c0_23 = arith.constant 0 : index
      %c0_24 = arith.constant 0 : index
      %31 = vector.load %arg4[%c0_23, %c0_24] : memref<16x16xf32, #tpu.memory_space<vmem>>, vector<16x16xf32>
      tpu.vector_store %arg4[%c0_23, %c0_24], %30 {strides = array<i32>} : memref<16x16xf32, #tpu.memory_space<vmem>>, vector<16x16xf32>,
      %cst_25 = arith.constant 0.000000e+00 : f32
      %32 = vector.broadcast %cst_25 : f32 to vector<15x16xf32>
      %c0_26 = arith.constant 0 : index
      %c0_27 = arith.constant 0 : index
      %33 = vector.load %arg5[%c0_26, %c0_27] : memref<15x16xf32, #tpu.memory_space<vmem>>, vector<15x16xf32>
      tpu.vector_store %arg5[%c0_26, %c0_27], %32 {strides = array<i32>} : memref<15x16xf32, #tpu.memory_space<vmem>>, vector<15x16xf32>,
      %cst_28 = arith.constant 0.000000e+00 : f32
      %34 = vector.broadcast %cst_28 : f32 to vector<16x15xf32>
      %c0_29 = arith.constant 0 : index
      %c0_30 = arith.constant 0 : index
      %35 = vector.load %arg6[%c0_29, %c0_30] : memref<16x15xf32, #tpu.memory_space<vmem>>, vector<16x15xf32>
      tpu.vector_store %arg6[%c0_29, %c0_30], %34 {strides = array<i32>} : memref<16x15xf32, #tpu.memory_space<vmem>>, vector<16x15xf32>,
    } else {
    }
    %c0 = arith.constant 0 : index
    %c0_1 = arith.constant 0 : index
    %c0_2 = arith.constant 0 : index
    %3 = vector.load %arg1[%c0, %c0_1, %c0_2] : memref<8x16x16xf32, #tpu.memory_space<vmem>>, vector<8x16x16xf32>
    %c0_3 = arith.constant 0 : index
    %c0_4 = arith.constant 0 : index
    %c0_5 = arith.constant 0 : index
    %4 = vector.load %arg2[%c0_3, %c0_4, %c0_5] : memref<8x16x16xf32, #tpu.memory_space<vmem>>, vector<8x16x16xf32>
    %5 = arith.subf %3, %4 : vector<8x16x16xf32>
    %c0_6 = arith.constant 0 : index
    %c0_7 = arith.constant 0 : index
    %6 = vector.load %arg4[%c0_6, %c0_7] : memref<16x16xf32, #tpu.memory_space<vmem>>, vector<16x16xf32>
    %7 = arith.mulf %5, %5 : vector<8x16x16xf32>
    %cst = arith.constant dense<0.000000e+00> : vector<16x16xf32>
    %8 = vector.multi_reduction <add>, %7, %cst [0] : vector<8x16x16xf32> to vector<16x16xf32>
    %9 = arith.addf %6, %8 : vector<16x16xf32>
    %c0_8 = arith.constant 0 : index
    %c0_9 = arith.constant 0 : index
    %10 = vector.load %arg4[%c0_8, %c0_9] : memref<16x16xf32, #tpu.memory_space<vmem>>, vector<16x16xf32>
    tpu.vector_store %arg4[%c0_8, %c0_9], %9 {strides = array<i32>} : memref<16x16xf32, #tpu.memory_space<vmem>>, vector<16x16xf32>,
    %11 = vector.extract_strided_slice %5 {offsets = [0, 1, 0], sizes = [8, 15, 16], strides = [1, 1, 1]} : vector<8x16x16xf32> to vector<8x15x16xf32>
    %12 = vector.extract_strided_slice %5 {offsets = [0, 0, 0], sizes = [8, 15, 16], strides = [1, 1, 1]} : vector<8x16x16xf32> to vector<8x15x16xf32>
    %13 = arith.subf %11, %12 : vector<8x15x16xf32>
    %14 = vector.extract_strided_slice %5 {offsets = [0, 0, 1], sizes = [8, 16, 15], strides = [1, 1, 1]} : vector<8x16x16xf32> to vector<8x16x15xf32>
    %15 = vector.extract_strided_slice %5 {offsets = [0, 0, 0], sizes = [8, 16, 15], strides = [1, 1, 1]} : vector<8x16x16xf32> to vector<8x16x15xf32>
    %16 = arith.subf %14, %15 : vector<8x16x15xf32>
    %c0_10 = arith.constant 0 : index
    %c0_11 = arith.constant 0 : index
    %17 = vector.load %arg5[%c0_10, %c0_11] : memref<15x16xf32, #tpu.memory_space<vmem>>, vector<15x16xf32>
    %18 = math.absf %13 : vector<8x15x16xf32>
    %cst_12 = arith.constant dense<0.000000e+00> : vector<15x16xf32>
    %19 = vector.multi_reduction <add>, %18, %cst_12 [0] : vector<8x15x16xf32> to vector<15x16xf32>
    %20 = arith.addf %17, %19 : vector<15x16xf32>
    %c0_13 = arith.constant 0 : index
    %c0_14 = arith.constant 0 : index
    %21 = vector.load %arg5[%c0_13, %c0_14] : memref<15x16xf32, #tpu.memory_space<vmem>>, vector<15x16xf32>
    tpu.vector_store %arg5[%c0_13, %c0_14], %20 {strides = array<i32>} : memref<15x16xf32, #tpu.memory_space<vmem>>, vector<15x16xf32>,
    %c0_15 = arith.constant 0 : index
    %c0_16 = arith.constant 0 : index
    %22 = vector.load %arg6[%c0_15, %c0_16] : memref<16x15xf32, #tpu.memory_space<vmem>>, vector<16x15xf32>
    %23 = math.absf %16 : vector<8x16x15xf32>
    %cst_17 = arith.constant dense<0.000000e+00> : vector<16x15xf32>
    %24 = vector.multi_reduction <add>, %23, %cst_17 [0] : vector<8x16x15xf32> to vector<16x15xf32>
    %25 = arith.addf %22, %24 : vector<16x15xf32>
    %c0_18 = arith.constant 0 : index
    %c0_19 = arith.constant 0 : index
    %26 = vector.load %arg6[%c0_18, %c0_19] : memref<16x15xf32, #tpu.memory_space<vmem>>, vector<16x15xf32>
    tpu.vector_store %arg6[%c0_18, %c0_19], %25 {strides = array<i32>} : memref<16x15xf32, #tpu.memory_space<vmem>>, vector<16x15xf32>,
    %c0_i32_20 = arith.constant 0 : i32
    %27 = arith.cmpi eq, %arg0, %c0_i32_20 : i32
    %28 = arith.extui %27 : i1 to i32
    %c0_i32_21 = arith.constant 0 : i32
    %29 = arith.cmpi ne, %28, %c0_i32_21 : i32
    scf.if %29 {
      %c0_22 = arith.constant 0 : index
      %c0_23 = arith.constant 0 : index
      %30 = vector.load %arg4[%c0_22, %c0_23] : memref<16x16xf32, #tpu.memory_space<vmem>>, vector<16x16xf32>
      %31 = vector.shape_cast %30 : vector<16x16xf32> to vector<1x16x16xf32>
      %cst_24 = arith.constant dense<0.000000e+00> : vector<1xf32>
      %32 = vector.multi_reduction <add>, %31, %cst_24 [1, 2] : vector<1x16x16xf32> to vector<1xf32>
      %33 = vector.shape_cast %32 : vector<1xf32> to vector<1x1x1xf32>
      %34 = vector.extract %33[0, 0, 0] : f32 from vector<1x1x1xf32>
      %c0_25 = arith.constant 0 : index
      %35 = memref.load %arg3[%c0_25] : memref<3xf32, #tpu.memory_space<smem>>
      memref.store %34, %arg3[%c0_25] : memref<3xf32, #tpu.memory_space<smem>>
      %c0_26 = arith.constant 0 : index
      %c0_27 = arith.constant 0 : index
      %36 = vector.load %arg5[%c0_26, %c0_27] : memref<15x16xf32, #tpu.memory_space<vmem>>, vector<15x16xf32>
      %37 = vector.shape_cast %36 : vector<15x16xf32> to vector<1x15x16xf32>
      %cst_28 = arith.constant dense<0.000000e+00> : vector<1xf32>
      %38 = vector.multi_reduction <add>, %37, %cst_28 [1, 2] : vector<1x15x16xf32> to vector<1xf32>
      %39 = vector.shape_cast %38 : vector<1xf32> to vector<1x1x1xf32>
      %40 = vector.extract %39[0, 0, 0] : f32 from vector<1x1x1xf32>
      %c1 = arith.constant 1 : index
      %41 = memref.load %arg3[%c1] : memref<3xf32, #tpu.memory_space<smem>>
      memref.store %40, %arg3[%c1] : memref<3xf32, #tpu.memory_space<smem>>
      %c0_29 = arith.constant 0 : index
      %c0_30 = arith.constant 0 : index
      %42 = vector.load %arg6[%c0_29, %c0_30] : memref<16x15xf32, #tpu.memory_space<vmem>>, vector<16x15xf32>
      %43 = vector.shape_cast %42 : vector<16x15xf32> to vector<1x16x15xf32>
      %cst_31 = arith.constant dense<0.000000e+00> : vector<1xf32>
      %44 = vector.multi_reduction <add>, %43, %cst_31 [1, 2] : vector<1x16x15xf32> to vector<1xf32>
      %45 = vector.shape_cast %44 : vector<1xf32> to vector<1x1x1xf32>
      %46 = vector.extract %45[0, 0, 0] : f32 from vector<1x1x1xf32>
      %c2 = arith.constant 2 : index
      %47 = memref.load %arg3[%c2] : memref<3xf32, #tpu.memory_space<smem>>
      memref.store %46, %arg3[%c2] : memref<3xf32, #tpu.memory_space<smem>>
    } else {
    }
    return
  }
  func.func @transform_0(%arg0: i32) -> (i32, i32, i32) {
    %c0_i32 = arith.constant 0 : i32
    %c0_i32_0 = arith.constant 0 : i32
    %c0_i32_1 = arith.constant 0 : i32
    return %arg0, %c0_i32, %c0_i32_0 : i32, i32, i32
  }
  func.func @transform_1(%arg0: i32) -> (i32, i32, i32) {
    %c0_i32 = arith.constant 0 : i32
    %c0_i32_0 = arith.constant 0 : i32
    %c0_i32_1 = arith.constant 0 : i32
    return %arg0, %c0_i32, %c0_i32_0 : i32, i32, i32
  }
  func.func @transform_2(%arg0: i32) -> i32 {
    %c0_i32 = arith.constant 0 : i32
    %c0_i32_0 = arith.constant 0 : i32
    return %c0_i32 : i32
  }
}

</mosaic_0001>

<llo_original>
// kernel: tpu_custom_call.1
$region0: #{tpu_custom_call.1}
  #allocation0 [shape = 'u32[]', space=smem, size = 0x4, offset = 0x4, fixed_abs, tag = 'smem constant byte address 0x4 - core index']
  #allocation1 [shape = 'u32[72,128]{1,0:T(1,128)}', space=vmem, size = 0x9000, scoped, tag = 'internal scratch']
  #allocation2 [shape = 'f32[16,16]{1,0:T(8,128)}', space=vmem, size = 0x2000, scoped, tag = 'scratch operand']
  #allocation3 [shape = 'f32[15,16]{1,0:T(8,128)}', space=vmem, size = 0x2000, scoped, tag = 'scratch operand']
  #allocation4 [shape = 'f32[16,15]{1,0:T(8,128)}', space=vmem, size = 0x2000, scoped, tag = 'scratch operand']
  %s0 = inlined_call_operand.hbm [shape: f32[8,16,16], index: 0, kind: input, shape index: {}]
  %s1 = inlined_call_operand.hbm [shape: f32[8,16,16], index: 1, kind: input, shape index: {}]
  %s2 = inlined_call_operand.hbm [shape: f32[3], index: 2, kind: output, shape index: {}]
  %s3 = sld [smem:[#allocation0]]
  $region34: #{tpu_custom_call.1} parent=0
    _
  %s5 = ssub.s32 1, %s3
  %s6 = scalar_select 0, %s5, %s3
  $region1: #{tpu_custom_call.1} parent=0
    #allocation5 [shape = 'u8[65536]{0}', space=vmem, size = 0x10000, scoped, tag = 'input window, operand 0, single buffered']
    #allocation6 [shape = 's32[1]{0}', space=sflag, size = 0x4, scoped, tag = 'scoped memory for tpu_custom_call.1']
    #allocation7 [shape = 's32[1]{0}', space=sflag, size = 0x4, scoped, tag = 'scoped memory for tpu_custom_call.1']
    #allocation8 [shape = 'u8[65536]{0}', space=vmem, size = 0x10000, scoped, tag = 'input window, operand 1, single buffered']
    #allocation9 [shape = 's32[1]{0}', space=sflag, size = 0x4, scoped, tag = 'scoped memory for tpu_custom_call.1']
    #allocation10 [shape = 'u8[512]{0}', space=smem, size = 0x200, scoped, tag = 'output window, operand 0, single buffered']
    %7 = vsyncpa [#allocation6], 0
    %8 = vsyncpa [#allocation9], 0
    %9 = vsyncpa [#allocation7], 0
    // Predicated region
    $region2: #{tpu_custom_call.1} parent=1 // pred_check
      _
    $region3: #{tpu_custom_call.1} parent=1 // pred_check_branch
      %11 = sbr.rel (0) target = $region5
    $region4: #{tpu_custom_call.1} parent=1 // pred_region
      %13 = vsyncadd [#allocation6], 0
      %s14 = sshll.u32 %s0, 4
      %s15 = int_to_ptr.hbm [resolvable:$true] %s14
      %s16 = sshll.u32 [#allocation5], 4
      %s17 = int_to_ptr.vmem [resolvable:$true] %s16
      %22 = dma.hbm_to_vmem [thread:$0]  %s15, 2048, %s17, [#allocation6], 128, 128, 8
    $region5: #{tpu_custom_call.1} parent=1 // pred_fallthru
      _
    // Predicated region
    $region6: #{tpu_custom_call.1} parent=1 // pred_check
      _
    $region7: #{tpu_custom_call.1} parent=1 // pred_check_branch
      %24 = sbr.rel (0) target = $region9
    $region8: #{tpu_custom_call.1} parent=1 // pred_region
      %26 = vsyncadd [#allocation9], 0
      %s27 = sshll.u32 %s1, 4
      %s28 = int_to_ptr.hbm [resolvable:$true] %s27
      %s29 = sshll.u32 [#allocation8], 4
      %s30 = int_to_ptr.vmem [resolvable:$true] %s29
      %35 = dma.hbm_to_vmem [thread:$0]  %s28, 2048, %s30, [#allocation9], 128, 128, 8
    $region9: #{tpu_custom_call.1} parent=1 // pred_fallthru
      _
    // Predicated region
    $region10: #{tpu_custom_call.1} parent=1 // pred_check
      _
    $region11: #{tpu_custom_call.1} parent=1 // pred_check_branch
      %37 = sbr.rel (0) target = $region13
    $region12: #{tpu_custom_call.1} parent=1 // pred_region
      %39 = dma.done [#allocation6], 2048
    $region13: #{tpu_custom_call.1} parent=1 // pred_fallthru
      _
    // Predicated region
    $region14: #{tpu_custom_call.1} parent=1 // pred_check
      _
    $region15: #{tpu_custom_call.1} parent=1 // pred_check_branch
      %41 = sbr.rel (0) target = $region17
    $region16: #{tpu_custom_call.1} parent=1 // pred_region
      %43 = dma.done [#allocation9], 2048
    $region17: #{tpu_custom_call.1} parent=1 // pred_fallthru
      _
    %p44 = scmp.eq.s32.totalorder 0, 0
    // Predicated region
    $region18: #{tpu_custom_call.1} parent=1 // pred_check
      %p45 = pneg %p44
    $region19: #{tpu_custom_call.1} parent=1 // pred_check_branch
      %47 = sbr.rel (%p45) target = $region21
    $region20: #{tpu_custom_call.1} parent=1 // pred_region
      %vm48 = vcmask 130048
      %49 = vst.msk [vmem:[#allocation2] sm:$0xff] %vm48, 0.0
      %50 = vst.msk [vmem:[#allocation2 + $0x8] sm:$0xff] %vm48, 0.0
      %51 = vst.msk [vmem:[#allocation3] sm:$0xff] %vm48, 0.0
      %vm52 = vcmask 129024
      %53 = vst.msk [vmem:[#allocation3 + $0x8] sm:$0x7f] %vm52, 0.0
      %vm54 = vcmask 121856
      %55 = vst.msk [vmem:[#allocation4] sm:$0xff] %vm54, 0.0
      %56 = vst.msk [vmem:[#allocation4 + $0x8] sm:$0xff] %vm54, 0.0
    $region21: #{tpu_custom_call.1} parent=1 // pred_fallthru
      _
    %v57 = vld [vmem:[#allocation5] sm:$0xff]
    %v58 = vld [vmem:[#allocation5 + $0x8] sm:$0xff]
    %v59 = vld [vmem:[#allocation5 + $0x10] sm:$0xff]
    %v60 = vld [vmem:[#allocation5 + $0x18] sm:$0xff]
    %v61 = vld [vmem:[#allocation5 + $0x20] sm:$0xff]
    %v62 = vld [vmem:[#allocation5 + $0x28] sm:$0xff]
    %v63 = vld [vmem:[#allocation5 + $0x30] sm:$0xff]
    %v64 = vld [vmem:[#allocation5 + $0x38] sm:$0xff]
    %v65 = vld [vmem:[#allocation5 + $0x40] sm:$0xff]
    %v66 = vld [vmem:[#allocation5 + $0x48] sm:$0xff]
    %v67 = vld [vmem:[#allocation5 + $0x50] sm:$0xff]
    %v68 = vld [vmem:[#allocation5 + $0x58] sm:$0xff]
    %v69 = vld [vmem:[#allocation5 + $0x60] sm:$0xff]
    %v70 = vld [vmem:[#allocation5 + $0x68] sm:$0xff]
    %v71 = vld [vmem:[#allocation5 + $0x70] sm:$0xff]
    %v72 = vld [vmem:[#allocation5 + $0x78] sm:$0xff]
    %v73 = vld [vmem:[#allocation8] sm:$0xff]
    %v74 = vld [vmem:[#allocation8 + $0x8] sm:$0xff]
    %v75 = vld [vmem:[#allocation8 + $0x10] sm:$0xff]
    %v76 = vld [vmem:[#allocation8 + $0x18] sm:$0xff]
    %v77 = vld [vmem:[#allocation8 + $0x20] sm:$0xff]
    %v78 = vld [vmem:[#allocation8 + $0x28] sm:$0xff]
    %v79 = vld [vmem:[#allocation8 + $0x30] sm:$0xff]
    %v80 = vld [vmem:[#allocation8 + $0x38] sm:$0xff]
    %v81 = vld [vmem:[#allocation8 + $0x40] sm:$0xff]
    %v82 = vld [vmem:[#allocation8 + $0x48] sm:$0xff]
    %v83 = vld [vmem:[#allocation8 + $0x50] sm:$0xff]
    %v84 = vld [vmem:[#allocation8 + $0x58] sm:$0xff]
    %v85 = vld [vmem:[#allocation8 + $0x60] sm:$0xff]
    %v86 = vld [vmem:[#allocation8 + $0x68] sm:$0xff]
    %v87 = vld [vmem:[#allocation8 + $0x70] sm:$0xff]
    %v88 = vld [vmem:[#allocation8 + $0x78] sm:$0xff]
    %v89 = vsub.f32 %v57, %v73
    %v90 = vsub.f32 %v58, %v74
    %v91 = vsub.f32 %v59, %v75
    %v92 = vsub.f32 %v60, %v76
    %v93 = vsub.f32 %v61, %v77
    %v94 = vsub.f32 %v62, %v78
    %v95 = vsub.f32 %v63, %v79
    %v96 = vsub.f32 %v64, %v80
    %v97 = vsub.f32 %v65, %v81
    %v98 = vsub.f32 %v66, %v82
    %v99 = vsub.f32 %v67, %v83
    %v100 = vsub.f32 %v68, %v84
    %v101 = vsub.f32 %v69, %v85
    %v102 = vsub.f32 %v70, %v86
    %v103 = vsub.f32 %v71, %v87
    %v104 = vsub.f32 %v72, %v88
    %v105 = vld [vmem:[#allocation2] sm:$0xff]
    %v106 = vld [vmem:[#allocation2 + $0x8] sm:$0xff]
    %v107 = vmul.f32 %v89, %v89
    %v108 = vmul.f32 %v90, %v90
    %v109 = vmul.f32 %v91, %v91
    %v110 = vmul.f32 %v92, %v92
    %v111 = vmul.f32 %v93, %v93
    %v112 = vmul.f32 %v94, %v94
    %v113 = vmul.f32 %v95, %v95
    %v114 = vmul.f32 %v96, %v96
    %v115 = vmul.f32 %v97, %v97
    %v116 = vmul.f32 %v98, %v98
    %v117 = vmul.f32 %v99, %v99
    %v118 = vmul.f32 %v100, %v100
    %v119 = vmul.f32 %v101, %v101
    %v120 = vmul.f32 %v102, %v102
    %v121 = vmul.f32 %v103, %v103
    %v122 = vmul.f32 %v104, %v104
    %vm123 = vcmask 130048
    %v124 = vsel %vm123, %v107, 0.0
    %v125 = vsel %vm123, %v109, 0.0
    %v126 = vadd.f32 %v124, %v125
    %v127 = vsel %vm123, %v111, 0.0
    %v128 = vadd.f32 %v126, %v127
    %v129 = vsel %vm123, %v113, 0.0
    %v130 = vadd.f32 %v128, %v129
    %v131 = vsel %vm123, %v115, 0.0
    %v132 = vadd.f32 %v130, %v131
    %v133 = vsel %vm123, %v117, 0.0
    %v134 = vadd.f32 %v132, %v133
    %v135 = vsel %vm123, %v119, 0.0
    %v136 = vadd.f32 %v134, %v135
    %v137 = vsel %vm123, %v121, 0.0
    %v138 = vadd.f32 %v136, %v137
    %v139 = vsel %vm123, %v108, 0.0
    %v140 = vsel %vm123, %v110, 0.0
    %v141 = vadd.f32 %v139, %v140
    %v142 = vsel %vm123, %v112, 0.0
    %v143 = vadd.f32 %v141, %v142
    %v144 = vsel %vm123, %v114, 0.0
    %v145 = vadd.f32 %v143, %v144
    %v146 = vsel %vm123, %v116, 0.0
    %v147 = vadd.f32 %v145, %v146
    %v148 = vsel %vm123, %v118, 0.0
    %v149 = vadd.f32 %v147, %v148
    %v150 = vsel %vm123, %v120, 0.0
    %v151 = vadd.f32 %v149, %v150
    %v152 = vsel %vm123, %v122, 0.0
    %v153 = vadd.f32 %v151, %v152
    %v154 = vadd.f32 %v105, %v138
    %v155 = vadd.f32 %v106, %v153
    %156 = vst.msk [vmem:[#allocation2] sm:$0xff] %vm123, %v154
    %157 = vst.msk [vmem:[#allocation2 + $0x8] sm:$0xff] %vm123, %v155
    %vm174 = vcmask 1040384
    %v175 = vrot.slane %v89, 7
    %v176 = vrot.slane %v90, 7
    %v177 = vsel %vm174, %v175, %v176
    %v178 = vrot.slane %v91, 7
    %v179 = vrot.slane %v92, 7
    %v180 = vsel %vm174, %v178, %v179
    %v181 = vrot.slane %v93, 7
    %v182 = vrot.slane %v94, 7
    %v183 = vsel %vm174, %v181, %v182
    %v184 = vrot.slane %v95, 7
    %v185 = vrot.slane %v96, 7
    %v186 = vsel %vm174, %v184, %v185
    %v187 = vrot.slane %v97, 7
    %v188 = vrot.slane %v98, 7
    %v189 = vsel %vm174, %v187, %v188
    %v190 = vrot.slane %v99, 7
    %v191 = vrot.slane %v100, 7
    %v192 = vsel %vm174, %v190, %v191
    %v193 = vrot.slane %v101, 7
    %v194 = vrot.slane %v102, 7
    %v195 = vsel %vm174, %v193, %v194
    %v196 = vrot.slane %v103, 7
    %v197 = vrot.slane %v104, 7
    %v198 = vsel %vm174, %v196, %v197
    %v215 = vsub.f32 %v89, %v175
    %v216 = vsub.f32 %v90, %v177
    %v217 = vsub.f32 %v91, %v178
    %v218 = vsub.f32 %v92, %v180
    %v219 = vsub.f32 %v93, %v181
    %v220 = vsub.f32 %v94, %v183
    %v221 = vsub.f32 %v95, %v184
    %v222 = vsub.f32 %v96, %v186
    %v223 = vsub.f32 %v97, %v187
    %v224 = vsub.f32 %v98, %v189
    %v225 = vsub.f32 %v99, %v190
    %v226 = vsub.f32 %v100, %v192
    %v227 = vsub.f32 %v101, %v193
    %v228 = vsub.f32 %v102, %v195
    %v229 = vsub.f32 %v103, %v196
    %v230 = vsub.f32 %v104, %v198
    %231 = vrot.lane.b32.xlu0 %v89, 1
    %v232 = vpop.permute.xlu0 %231
    %233 = vrot.lane.b32.xlu0 %v90, 1
    %v234 = vpop.permute.xlu0 %233
    %235 = vrot.lane.b32.xlu0 %v91, 1
    %v236 = vpop.permute.xlu0 %235
    %237 = vrot.lane.b32.xlu0 %v92, 1
    %v238 = vpop.permute.xlu0 %237
    %239 = vrot.lane.b32.xlu0 %v93, 1
    %v240 = vpop.permute.xlu0 %239
    %241 = vrot.lane.b32.xlu0 %v94, 1
    %v242 = vpop.permute.xlu0 %241
    %243 = vrot.lane.b32.xlu0 %v95, 1
    %v244 = vpop.permute.xlu0 %243
    %245 = vrot.lane.b32.xlu0 %v96, 1
    %v246 = vpop.permute.xlu0 %245
    %247 = vrot.lane.b32.xlu0 %v97, 1
    %v248 = vpop.permute.xlu0 %247
    %249 = vrot.lane.b32.xlu0 %v98, 1
    %v250 = vpop.permute.xlu0 %249
    %251 = vrot.lane.b32.xlu0 %v99, 1
    %v252 = vpop.permute.xlu0 %251
    %253 = vrot.lane.b32.xlu0 %v100, 1
    %v254 = vpop.permute.xlu0 %253
    %255 = vrot.lane.b32.xlu0 %v101, 1
    %v256 = vpop.permute.xlu0 %255
    %257 = vrot.lane.b32.xlu0 %v102, 1
    %v258 = vpop.permute.xlu0 %257
    %259 = vrot.lane.b32.xlu0 %v103, 1
    %v260 = vpop.permute.xlu0 %259
    %261 = vrot.lane.b32.xlu0 %v104, 1
    %v262 = vpop.permute.xlu0 %261
    %v279 = vsub.f32 %v89, %v232
    %v280 = vsub.f32 %v90, %v234
    %v281 = vsub.f32 %v91, %v236
    %v282 = vsub.f32 %v92, %v238
    %v283 = vsub.f32 %v93, %v240
    %v284 = vsub.f32 %v94, %v242
    %v285 = vsub.f32 %v95, %v244
    %v286 = vsub.f32 %v96, %v246
    %v287 = vsub.f32 %v97, %v248
    %v288 = vsub.f32 %v98, %v250
    %v289 = vsub.f32 %v99, %v252
    %v290 = vsub.f32 %v100, %v254
    %v291 = vsub.f32 %v101, %v256
    %v292 = vsub.f32 %v102, %v258
    %v293 = vsub.f32 %v103, %v260
    %v294 = vsub.f32 %v104, %v262
    %v295 = vld [vmem:[#allocation3] sm:$0xff]
    %v296 = vld [vmem:[#allocation3 + $0x8] sm:$0x7f]
    %v297 = vand.u32 2147483647, %v215
    %v298 = vand.u32 2147483647, %v216
    %v299 = vand.u32 2147483647, %v217
    %v300 = vand.u32 2147483647, %v218
    %v301 = vand.u32 2147483647, %v219
    %v302 = vand.u32 2147483647, %v220
    %v303 = vand.u32 2147483647, %v221
    %v304 = vand.u32 2147483647, %v222
    %v305 = vand.u32 2147483647, %v223
    %v306 = vand.u32 2147483647, %v224
    %v307 = vand.u32 2147483647, %v225
    %v308 = vand.u32 2147483647, %v226
    %v309 = vand.u32 2147483647, %v227
    %v310 = vand.u32 2147483647, %v228
    %v311 = vand.u32 2147483647, %v229
    %v312 = vand.u32 2147483647, %v230
    %vm313 = vcmask 130049
    %v314 = vsel %vm313, %v297, 0.0
    %v315 = vsel %vm313, %v299, 0.0
    %v316 = vadd.f32 %v314, %v315
    %v317 = vsel %vm313, %v301, 0.0
    %v318 = vadd.f32 %v316, %v317
    %v319 = vsel %vm313, %v303, 0.0
    %v320 = vadd.f32 %v318, %v319
    %v321 = vsel %vm313, %v305, 0.0
    %v322 = vadd.f32 %v320, %v321
    %v323 = vsel %vm313, %v307, 0.0
    %v324 = vadd.f32 %v322, %v323
    %v325 = vsel %vm313, %v309, 0.0
    %v326 = vadd.f32 %v324, %v325
    %v327 = vsel %vm313, %v311, 0.0
    %v328 = vadd.f32 %v326, %v327
    %v329 = vsel %vm123, %v298, 0.0
    %v330 = vsel %vm123, %v300, 0.0
    %v331 = vadd.f32 %v329, %v330
    %v332 = vsel %vm123, %v302, 0.0
    %v333 = vadd.f32 %v331, %v332
    %v334 = vsel %vm123, %v304, 0.0
    %v335 = vadd.f32 %v333, %v334
    %v336 = vsel %vm123, %v306, 0.0
    %v337 = vadd.f32 %v335, %v336
    %v338 = vsel %vm123, %v308, 0.0
    %v339 = vadd.f32 %v337, %v338
    %v340 = vsel %vm123, %v310, 0.0
    %v341 = vadd.f32 %v339, %v340
    %v342 = vsel %vm123, %v312, 0.0
    %v343 = vadd.f32 %v341, %v342
    %vm346 = vcmask 1046528
    %v347 = vrot.slane %v328, 1
    %v348 = vrot.slane %v343, 1
    %v349 = vsel %vm346, %v347, %v348
    %v352 = vadd.f32 %v295, %v349
    %v353 = vadd.f32 %v296, %v348
    %354 = vst.msk [vmem:[#allocation3] sm:$0xff] %vm123, %v352
    %vm355 = vcmask 129024
    %356 = vst.msk [vmem:[#allocation3 + $0x8] sm:$0x7f] %vm355, %v353
    %v357 = vld [vmem:[#allocation4] sm:$0xff]
    %v358 = vld [vmem:[#allocation4 + $0x8] sm:$0xff]
    %v359 = vand.u32 2147483647, %v279
    %v360 = vand.u32 2147483647, %v280
    %v361 = vand.u32 2147483647, %v281
    %v362 = vand.u32 2147483647, %v282
    %v363 = vand.u32 2147483647, %v283
    %v364 = vand.u32 2147483647, %v284
    %v365 = vand.u32 2147483647, %v285
    %v366 = vand.u32 2147483647, %v286
    %v367 = vand.u32 2147483647, %v287
    %v368 = vand.u32 2147483647, %v288
    %v369 = vand.u32 2147483647, %v289
    %v370 = vand.u32 2147483647, %v290
    %v371 = vand.u32 2147483647, %v291
    %v372 = vand.u32 2147483647, %v292
    %v373 = vand.u32 2147483647, %v293
    %v374 = vand.u32 2147483647, %v294
    %vm375 = vcmask 130056
    %v376 = vsel %vm375, %v359, 0.0
    %v377 = vsel %vm375, %v361, 0.0
    %v378 = vadd.f32 %v376, %v377
    %v379 = vsel %vm375, %v363, 0.0
    %v380 = vadd.f32 %v378, %v379
    %v381 = vsel %vm375, %v365, 0.0
    %v382 = vadd.f32 %v380, %v381
    %v383 = vsel %vm375, %v367, 0.0
    %v384 = vadd.f32 %v382, %v383
    %v385 = vsel %vm375, %v369, 0.0
    %v386 = vadd.f32 %v384, %v385
    %v387 = vsel %vm375, %v371, 0.0
    %v388 = vadd.f32 %v386, %v387
    %v389 = vsel %vm375, %v373, 0.0
    %v390 = vadd.f32 %v388, %v389
    %v391 = vsel %vm375, %v360, 0.0
    %v392 = vsel %vm375, %v362, 0.0
    %v393 = vadd.f32 %v391, %v392
    %v394 = vsel %vm375, %v364, 0.0
    %v395 = vadd.f32 %v393, %v394
    %v396 = vsel %vm375, %v366, 0.0
    %v397 = vadd.f32 %v395, %v396
    %v398 = vsel %vm375, %v368, 0.0
    %v399 = vadd.f32 %v397, %v398
    %v400 = vsel %vm375, %v370, 0.0
    %v401 = vadd.f32 %v399, %v400
    %v402 = vsel %vm375, %v372, 0.0
    %v403 = vadd.f32 %v401, %v402
    %v404 = vsel %vm375, %v374, 0.0
    %v405 = vadd.f32 %v403, %v404
    %408 = vrot.lane.b32.xlu0 %v390, 127
    %v409 = vpop.permute.xlu0 %408
    %410 = vrot.lane.b32.xlu0 %v405, 127
    %v411 = vpop.permute.xlu0 %410
    %v414 = vadd.f32 %v357, %v409
    %v415 = vadd.f32 %v358, %v411
    %vm416 = vcmask 121856
    %417 = vst.msk [vmem:[#allocation4] sm:$0xff] %vm416, %v414
    %418 = vst.msk [vmem:[#allocation4 + $0x8] sm:$0xff] %vm416, %v415
    // Predicated region
    $region22: #{tpu_custom_call.1} parent=1 // pred_check
      %p419 = pneg %p44
    $region23: #{tpu_custom_call.1} parent=1 // pred_check_branch
      %421 = sbr.rel (%p419) target = $region25
    $region24: #{tpu_custom_call.1} parent=1 // pred_region
      %v422 = vld [vmem:[#allocation2] sm:$0xff]
      %v423 = vld [vmem:[#allocation2 + $0x8] sm:$0xff]
      %v424 = vsel %vm123, %v422, 0.0
      %v425 = vsel %vm123, %v423, 0.0
      %v426 = vadd.f32 %v424, %v425
      %427 = vadd.xlane.f32.xlu0 %v426
      %v428 = vpop.xlane.xlu0 %427
      %v429 = vrot.slane %v428, 4
      %v430 = vadd.f32 %v428, %v429
      %v431 = vrot.slane %v430, 2
      %v432 = vadd.f32 %v430, %v431
      %v433 = vrot.slane %v432, 1
      %v434 = vadd.f32 %v432, %v433
      %s435 = vtos %v434
      %s436 = scalar_lea.smem [#allocation10], 0
      %437 = sst [smem:[%s436]] %s435
      %v438 = vld [vmem:[#allocation3] sm:$0xff]
      %v439 = vld [vmem:[#allocation3 + $0x8] sm:$0x7f]
      %v440 = vsel %vm123, %v438, 0.0
      %v441 = vsel %vm355, %v439, 0.0
      %v442 = vadd.f32 %v440, %v441
      %443 = vadd.xlane.f32.xlu0 %v442
      %v444 = vpop.xlane.xlu0 %443
      %v445 = vrot.slane %v444, 4
      %v446 = vadd.f32 %v444, %v445
      %v447 = vrot.slane %v446, 2
      %v448 = vadd.f32 %v446, %v447
      %v449 = vrot.slane %v448, 1
      %v450 = vadd.f32 %v448, %v449
      %s451 = vtos %v450
      %s452 = scalar_lea.smem [#allocation10], 1
      %453 = sst [smem:[%s452]] %s451
      %v454 = vld [vmem:[#allocation4] sm:$0xff]
      %v455 = vld [vmem:[#allocation4 + $0x8] sm:$0xff]
      %v456 = vsel %vm416, %v454, 0.0
      %v457 = vsel %vm416, %v455, 0.0
      %v458 = vadd.f32 %v456, %v457
      %459 = vadd.xlane.f32.xlu0 %v458
      %v460 = vpop.xlane.xlu0 %459
      %v461 = vrot.slane %v460, 4
      %v462 = vadd.f32 %v460, %v461
      %v463 = vrot.slane %v462, 2
      %v464 = vadd.f32 %v462, %v463
      %v465 = vrot.slane %v464, 1
      %v466 = vadd.f32 %v464, %v465
      %s467 = vtos %v466
      %s468 = scalar_lea.smem [#allocation10], 2
      %469 = sst [smem:[%s468]] %s467
    $region25: #{tpu_custom_call.1} parent=1 // pred_fallthru
      _
    // Predicated region
    $region26: #{tpu_custom_call.1} parent=1 // pred_check
      _
    $region27: #{tpu_custom_call.1} parent=1 // pred_check_branch
      %471 = sbr.rel (0) target = $region29
    $region28: #{tpu_custom_call.1} parent=1 // pred_region
      %473 = vsyncadd [#allocation7], 0
      %s475 = sshll.u32 %s2, 4
      %s476 = int_to_ptr.hbm [resolvable:$true] %s475
      %478 = dma.smem_to_hbm [#allocation10], 16, %s476, [#allocation7]
    $region29: #{tpu_custom_call.1} parent=1 // pred_fallthru
      _
    // Predicated region
    $region30: #{tpu_custom_call.1} parent=1 // pred_check
      _
    $region31: #{tpu_custom_call.1} parent=1 // pred_check_branch
      %480 = sbr.rel (0) target = $region33
    $region32: #{tpu_custom_call.1} parent=1 // pred_region
      %482 = dma.done [#allocation7], 16
    $region33: #{tpu_custom_call.1} parent=1 // pred_fallthru
      _
    %483 = sfence
    %484 = vsyncpa [#allocation6], 1
    %485 = vsyncpa [#allocation9], 1
    %486 = vsyncpa [#allocation7], 1

</llo_original>
